<compile_context>
chip_gen: v6e
topology: v6e:2x2x1
jax: 0.10.0
libtpu: 0.0.40
codegen_flags: <defaults>
</compile_context>

<pallas_src>
import jax
import jax.numpy as jnp
from jax import lax
from jax.experimental import pallas as pl
from jax.experimental.pallas import tpu as pltpu

EPSILON = 1e-6
_LANE = 128


def _vmem_capacity_bytes():
    """Per-TensorCore VMEM capacity; conservative default if the query fails."""
    try:
        info = pltpu.get_tpu_info()
        cap = getattr(info, "vmem_capacity_bytes", None)
        if cap:
            return int(cap)
    except Exception:
        pass
    return 64 * 1024 * 1024  # v7x per-TC size = smallest across v5e/v6e/v7x


def _default_num_splits():
    """Shard the pixel axis across TensorCores only on dual-TC chips (v7x)."""
    try:
        kind = jax.devices()[0].device_kind.lower()
    except Exception:
        return 1
    return 2 if "v7" in kind else 1


def _make_kernel(S, chunks_per_split, hw_valid, exact):
    block_pixels = S * _LANE
    full_chunks = hw_valid // block_pixels  # chunks containing only valid pixels

    def kernel(pred_ref, mask_ref, inter_out, card_out, inter_acc, card_acc):
        n = pl.program_id(1)
        c = pl.program_id(2)

        @pl.when((n == 0) & (c == 0))
        def _():
            inter_acc[...] = jnp.zeros_like(inter_acc)
            card_acc[...] = jnp.zeros_like(card_acc)

        x = pred_ref[0].astype(jnp.float32)  # (C, S, 128) logits
        m = mask_ref[0].astype(jnp.float32)  # (C, S, 128) one-hot target

        # Softmax over the channel axis (leading, non-tiled -> whole-vreg VPU).
        x_max = jnp.max(x, axis=0, keepdims=True)
        e = jnp.exp(x - x_max)
        denom = jnp.sum(e, axis=0, keepdims=True)
        prob = e * pl.reciprocal(denom, approx=True)  # EUP slot (free)

        inter_c = prob * m
        card_c = prob + m

        def accumulate(ic, cc):
            # Per-step sublane reduce (XLU, idle otherwise) -> tiny (C, 128)
            # accumulators; avoids a full-block VMEM read-modify-write.
            inter_acc[...] += jnp.sum(ic, axis=1)
            card_acc[...] += jnp.sum(cc, axis=1)

        if exact:
            accumulate(inter_c, card_c)
        else:
            gc = pl.program_id(0) * chunks_per_split + c  # global chunk index

            @pl.when(gc < full_chunks)
            def _():  # fully-valid chunk: no masking cost
                accumulate(inter_c, card_c)

            @pl.when(gc >= full_chunks)
            def _():  # straddling / out-of-range chunk: select away invalid pixels
                base = gc * block_pixels
                row = lax.broadcasted_iota(jnp.int32, (S, _LANE), 0)
                col = lax.broadcasted_iota(jnp.int32, (S, _LANE), 1)
                valid = (base + row * _LANE + col) < hw_valid
                accumulate(
                    jnp.where(valid[None], inter_c, 0.0),
                    jnp.where(valid[None], card_c, 0.0),
                )

        @pl.when((n == pl.num_programs(1) - 1) & (c == pl.num_programs(2) - 1))
        def _():
            inter_out[0] = inter_acc[...]  # (C, 128) lane-dense partials
            card_out[0] = card_acc[...]

    return kernel


def dice_loss_with_logits(pred, mask, *, num_splits=None):
    """pred, mask: (N, C, H, W).  Returns scalar float32 loss = 1 - mean(dice).

    Inputs may be f32 or bf16/fp16 (the kernel casts to f32 after the load;
    narrower inputs halve HBM traffic for this memory-bound kernel).
    """
    N, C, H, W = pred.shape
    assert mask.shape == pred.shape
    HW = H * W

    rows = pl.cdiv(HW, _LANE)      # 128-pixel rows per image
    HW_pad = rows * _LANE

    # ---- Block-size selection: big, chip-aware tiles -------------------------
    vmem_cap = _vmem_capacity_bytes()
    # ~8 MiB per input block on 128 MiB chips (v5e/v6e), ~4 MiB on 64 MiB (v7x):
    # 2 inputs x 2 pipeline buffers stay comfortably inside scoped VMEM.
    block_budget = min(8 * 1024 * 1024, vmem_cap // 16)
    itemsize = max(jnp.dtype(pred.dtype).itemsize, jnp.dtype(mask.dtype).itemsize)
    s_cap = max(8, block_budget // (C * _LANE * itemsize))

    if rows <= s_cap:
        S = rows                   # full row extent -> single chunk, no row pad
        total_chunks = 1
    else:
        S = (s_cap // 8) * 8       # (8, 128) tiling constraint
        total_chunks = pl.cdiv(rows, S)

    # ---- Pixel-axis split across TensorCores only where it helps -------------
    if num_splits is None:
        num_splits = _default_num_splits()
    num_splits = max(1, min(int(num_splits), total_chunks))
    chunks_per_split = pl.cdiv(total_chunks, num_splits)
    covered_chunks = num_splits * chunks_per_split
    needs_clamp = covered_chunks > total_chunks          # trace-time bool
    exact = covered_chunks * S * _LANE == HW             # trace-time bool

    # ---- Layout: free contiguous reshape; pad only the <=127-pixel tail ------
    pred3 = pred.reshape(N, C, HW)
    mask3 = mask.reshape(N, C, HW)
    if HW_pad != HW:
        pad = ((0, 0), (0, 0), (0, HW_pad - HW))
        pred3 = jnp.pad(pred3, pad)   # zero pixels, excluded by in-kernel mask
        mask3 = jnp.pad(mask3, pad)
    pred4 = pred3.reshape(N, C, rows, _LANE)
    mask4 = mask3.reshape(N, C, rows, _LANE)

    kernel = _make_kernel(S, chunks_per_split, HW, exact)

    def in_map(split, n, c):
        gc = split * chunks_per_split + c
        if needs_clamp:
            # Out-of-range chunks (odd chunk count split 2 ways) re-read the last
            # valid block; their contributions are zeroed in-kernel.
            gc = jnp.minimum(gc, total_chunks - 1)
        return (n, 0, gc, 0)

    def out_map(split, n, c):
        return (split, 0, 0)

    grid = (num_splits, N, chunks_per_split)

    block_elems = C * S * _LANE
    vmem_needed = 2 * block_elems * (
        jnp.dtype(pred.dtype).itemsize + jnp.dtype(mask.dtype).itemsize
    ) + (4 << 20)
    vmem_limit = int(min(max(vmem_needed, 32 << 20), 48 << 20))

    inter_part, card_part = pl.pallas_call(
        kernel,
        out_shape=(
            jax.ShapeDtypeStruct((num_splits, C, _LANE), jnp.float32),
            jax.ShapeDtypeStruct((num_splits, C, _LANE), jnp.float32),
        ),
        grid_spec=pltpu.PrefetchScalarGridSpec(
            num_scalar_prefetch=0,
            grid=grid,
            in_specs=[
                pl.BlockSpec((1, C, S, _LANE), in_map),
                pl.BlockSpec((1, C, S, _LANE), in_map),
            ],
            out_specs=(
                pl.BlockSpec((1, C, _LANE), out_map),
                pl.BlockSpec((1, C, _LANE), out_map),
            ),
            scratch_shapes=[
                pltpu.VMEM((C, _LANE), jnp.float32),
                pltpu.VMEM((C, _LANE), jnp.float32),
            ],
        ),
        compiler_params=pltpu.CompilerParams(
            dimension_semantics=("parallel", "arbitrary", "arbitrary"),
            vmem_limit_bytes=vmem_limit,
        ),
    )(pred4, mask4)

    # Tiny epilogue in plain JAX: combine per-split / per-lane partials.
    inter = jnp.sum(inter_part, axis=(0, 2))  # (C,)
    card = jnp.sum(card_part, axis=(0, 2))    # (C,)
    dice = 2.0 * inter / (card + EPSILON)
    return (1.0 - jnp.mean(dice)).astype(jnp.float32)


def _reference(pred, mask):
    prob = jax.nn.softmax(pred, axis=1)
    t = mask.astype(prob.dtype)
    dims = (0, 2, 3)
    intersection = jnp.sum(prob * t, axis=dims)
    cardinality = jnp.sum(prob + t, axis=dims)
    dice = jnp.mean(2.0 * intersection / (cardinality + EPSILON))
    return 1.0 - dice


if __name__ == "__main__":
    key = jax.random.PRNGKey(0)
    k1, k2 = jax.random.split(key)
    N, C, H, W = 2, 4, 16, 16

    pred = jax.random.normal(k1, (N, C, H, W), dtype=jnp.float32)
    labels = jax.random.randint(k2, (N, H, W), 0, C)
    mask = jax.nn.one_hot(labels, C, axis=1, dtype=jnp.float32)  # (N, C, H, W)

    loss = jax.block_until_ready(dice_loss_with_logits(pred, mask))
    ref = jax.block_until_ready(_reference(pred, mask))

    # Tolerance covers the approximate EUP reciprocal used in the softmax.
    assert jnp.allclose(loss, ref, atol=2e-3, rtol=2e-3), (loss, ref)
    print("KERNEL_OK")
</pallas_src>

<mosaic_0001>
module attributes {stable_mosaic.version = 11 : i64} {
  func.func @kernel(%arg0: i32, %arg1: i32, %arg2: i32, %arg3: memref<1x4x2x128xf32, #tpu.memory_space<vmem>>, %arg4: memref<1x4x2x128xf32, #tpu.memory_space<vmem>>, %arg5: memref<1x4x128xf32, #tpu.memory_space<vmem>>, %arg6: memref<1x4x128xf32, #tpu.memory_space<vmem>>, %arg7: memref<4x128xf32, #tpu.memory_space<vmem>>, %arg8: memref<4x128xf32, #tpu.memory_space<vmem>>) attributes {dimension_semantics = [#tpu.dimension_semantics<parallel>, #tpu.dimension_semantics<arbitrary>, #tpu.dimension_semantics<arbitrary>], iteration_bounds = array<i64: 1, 2, 1>, scalar_prefetch = 0 : i64, scratch_operands = 2 : i64, tpu.core_type = #tpu.core_type<tc>, window_params = [{transform_indices = @transform_0, window_bounds = array<i64: 1, 4, 2, 128>}, {transform_indices = @transform_1, window_bounds = array<i64: 1, 4, 2, 128>}, {transform_indices = @transform_2, window_bounds = array<i64: 1, 4, 128>}, {transform_indices = @transform_3, window_bounds = array<i64: 1, 4, 128>}]} {
    %c0_i32 = arith.constant 0 : i32
    %0 = arith.cmpi eq, %arg1, %c0_i32 : i32
    %c0_i32_0 = arith.constant 0 : i32
    %1 = arith.cmpi eq, %arg2, %c0_i32_0 : i32
    %2 = arith.andi %0, %1 : i1
    %3 = arith.extui %2 : i1 to i32
    %c0_i32_1 = arith.constant 0 : i32
    %4 = arith.cmpi ne, %3, %c0_i32_1 : i32
    scf.if %4 {
      %cst_22 = arith.constant 0.000000e+00 : f32
      %34 = vector.broadcast %cst_22 : f32 to vector<4x128xf32>
      %c0_23 = arith.constant 0 : index
      %c0_24 = arith.constant 0 : index
      %35 = vector.load %arg7[%c0_23, %c0_24] : memref<4x128xf32, #tpu.memory_space<vmem>>, vector<4x128xf32>
      tpu.vector_store %arg7[%c0_23, %c0_24], %34 {strides = array<i32>} : memref<4x128xf32, #tpu.memory_space<vmem>>, vector<4x128xf32>,
      %cst_25 = arith.constant 0.000000e+00 : f32
      %36 = vector.broadcast %cst_25 : f32 to vector<4x128xf32>
      %c0_26 = arith.constant 0 : index
      %c0_27 = arith.constant 0 : index
      %37 = vector.load %arg8[%c0_26, %c0_27] : memref<4x128xf32, #tpu.memory_space<vmem>>, vector<4x128xf32>
      tpu.vector_store %arg8[%c0_26, %c0_27], %36 {strides = array<i32>} : memref<4x128xf32, #tpu.memory_space<vmem>>, vector<4x128xf32>,
    } else {
    }
    %c0 = arith.constant 0 : index
    %c0_2 = arith.constant 0 : index
    %c0_3 = arith.constant 0 : index
    %c0_4 = arith.constant 0 : index
    %5 = vector.load %arg3[%c0, %c0_2, %c0_3, %c0_4] : memref<1x4x2x128xf32, #tpu.memory_space<vmem>>, vector<1x4x2x128xf32>
    %6 = vector.shape_cast %5 : vector<1x4x2x128xf32> to vector<4x2x128xf32>
    %c0_5 = arith.constant 0 : index
    %c0_6 = arith.constant 0 : index
    %c0_7 = arith.constant 0 : index
    %c0_8 = arith.constant 0 : index
    %7 = vector.load %arg4[%c0_5, %c0_6, %c0_7, %c0_8] : memref<1x4x2x128xf32, #tpu.memory_space<vmem>>, vector<1x4x2x128xf32>
    %8 = vector.shape_cast %7 : vector<1x4x2x128xf32> to vector<4x2x128xf32>
    %cst = arith.constant dense<0xFF800000> : vector<2x128xf32>
    %9 = vector.multi_reduction <maximumf>, %6, %cst [0] : vector<4x2x128xf32> to vector<2x128xf32>
    %10 = vector.shape_cast %9 : vector<2x128xf32> to vector<1x2x128xf32>
    %11 = vector.broadcast %10 : vector<1x2x128xf32> to vector<4x2x128xf32>
    %12 = arith.subf %6, %11 : vector<4x2x128xf32>
    %13 = math.exp %12 : vector<4x2x128xf32>
    %cst_9 = arith.constant dense<0.000000e+00> : vector<2x128xf32>
    %14 = vector.multi_reduction <add>, %13, %cst_9 [0] : vector<4x2x128xf32> to vector<2x128xf32>
    %15 = vector.shape_cast %14 : vector<2x128xf32> to vector<1x2x128xf32>
    %16 = tpu.reciprocal %15 {approx = true} : vector<1x2x128xf32> -> vector<1x2x128xf32>
    %17 = vector.broadcast %16 : vector<1x2x128xf32> to vector<4x2x128xf32>
    %18 = arith.mulf %13, %17 : vector<4x2x128xf32>
    %19 = arith.mulf %18, %8 : vector<4x2x128xf32>
    %20 = arith.addf %18, %8 : vector<4x2x128xf32>
    %c0_10 = arith.constant 0 : index
    %c0_11 = arith.constant 0 : index
    %21 = vector.load %arg7[%c0_10, %c0_11] : memref<4x128xf32, #tpu.memory_space<vmem>>, vector<4x128xf32>
    %cst_12 = arith.constant dense<0.000000e+00> : vector<4x128xf32>
    %22 = vector.multi_reduction <add>, %19, %cst_12 [1] : vector<4x2x128xf32> to vector<4x128xf32>
    %23 = arith.addf %21, %22 : vector<4x128xf32>
    %c0_13 = arith.constant 0 : index
    %c0_14 = arith.constant 0 : index
    %24 = vector.load %arg7[%c0_13, %c0_14] : memref<4x128xf32, #tpu.memory_space<vmem>>, vector<4x128xf32>
    tpu.vector_store %arg7[%c0_13, %c0_14], %23 {strides = array<i32>} : memref<4x128xf32, #tpu.memory_space<vmem>>, vector<4x128xf32>,
    %c0_15 = arith.constant 0 : index
    %c0_16 = arith.constant 0 : index
    %25 = vector.load %arg8[%c0_15, %c0_16] : memref<4x128xf32, #tpu.memory_space<vmem>>, vector<4x128xf32>
    %cst_17 = arith.constant dense<0.000000e+00> : vector<4x128xf32>
    %26 = vector.multi_reduction <add>, %20, %cst_17 [1] : vector<4x2x128xf32> to vector<4x128xf32>
    %27 = arith.addf %25, %26 : vector<4x128xf32>
    %c0_18 = arith.constant 0 : index
    %c0_19 = arith.constant 0 : index
    %28 = vector.load %arg8[%c0_18, %c0_19] : memref<4x128xf32, #tpu.memory_space<vmem>>, vector<4x128xf32>
    tpu.vector_store %arg8[%c0_18, %c0_19], %27 {strides = array<i32>} : memref<4x128xf32, #tpu.memory_space<vmem>>, vector<4x128xf32>,
    %c1_i32 = arith.constant 1 : i32
    %29 = arith.cmpi eq, %arg1, %c1_i32 : i32
    %c0_i32_20 = arith.constant 0 : i32
    %30 = arith.cmpi eq, %arg2, %c0_i32_20 : i32
    %31 = arith.andi %29, %30 : i1
    %32 = arith.extui %31 : i1 to i32
    %c0_i32_21 = arith.constant 0 : i32
    %33 = arith.cmpi ne, %32, %c0_i32_21 : i32
    scf.if %33 {
      %c0_22 = arith.constant 0 : index
      %c0_23 = arith.constant 0 : index
      %34 = vector.load %arg7[%c0_22, %c0_23] : memref<4x128xf32, #tpu.memory_space<vmem>>, vector<4x128xf32>
      %c0_24 = arith.constant 0 : index
      %c0_25 = arith.constant 0 : index
      %c0_26 = arith.constant 0 : index
      %35 = vector.load %arg5[%c0_24, %c0_25, %c0_26] : memref<1x4x128xf32, #tpu.memory_space<vmem>>, vector<1x4x128xf32>
      %36 = vector.shape_cast %35 : vector<1x4x128xf32> to vector<4x128xf32>
      %37 = vector.shape_cast %34 : vector<4x128xf32> to vector<1x4x128xf32>
      tpu.vector_store %arg5[%c0_24, %c0_25, %c0_26], %37 {strides = array<i32>} : memref<1x4x128xf32, #tpu.memory_space<vmem>>, vector<1x4x128xf32>,
      %c0_27 = arith.constant 0 : index
      %c0_28 = arith.constant 0 : index
      %38 = vector.load %arg8[%c0_27, %c0_28] : memref<4x128xf32, #tpu.memory_space<vmem>>, vector<4x128xf32>
      %c0_29 = arith.constant 0 : index
      %c0_30 = arith.constant 0 : index
      %c0_31 = arith.constant 0 : index
      %39 = vector.load %arg6[%c0_29, %c0_30, %c0_31] : memref<1x4x128xf32, #tpu.memory_space<vmem>>, vector<1x4x128xf32>
      %40 = vector.shape_cast %39 : vector<1x4x128xf32> to vector<4x128xf32>
      %41 = vector.shape_cast %38 : vector<4x128xf32> to vector<1x4x128xf32>
      tpu.vector_store %arg6[%c0_29, %c0_30, %c0_31], %41 {strides = array<i32>} : memref<1x4x128xf32, #tpu.memory_space<vmem>>, vector<1x4x128xf32>,
    } else {
    }
    return
  }
  func.func @transform_0(%arg0: i32, %arg1: i32, %arg2: i32) -> (i32, i32, i32, i32) {
    %c1_i32 = arith.constant 1 : i32
    %0 = arith.muli %arg0, %c1_i32 : i32
    %1 = arith.addi %0, %arg2 : i32
    %c0_i32 = arith.constant 0 : i32
    %c0_i32_0 = arith.constant 0 : i32
    %c0_i32_1 = arith.constant 0 : i32
    return %arg1, %c0_i32, %1, %c0_i32_0 : i32, i32, i32, i32
  }
  func.func @transform_1(%arg0: i32, %arg1: i32, %arg2: i32) -> (i32, i32, i32, i32) {
    %c1_i32 = arith.constant 1 : i32
    %0 = arith.muli %arg0, %c1_i32 : i32
    %1 = arith.addi %0, %arg2 : i32
    %c0_i32 = arith.constant 0 : i32
    %c0_i32_0 = arith.constant 0 : i32
    %c0_i32_1 = arith.constant 0 : i32
    return %arg1, %c0_i32, %1, %c0_i32_0 : i32, i32, i32, i32
  }
  func.func @transform_2(%arg0: i32, %arg1: i32, %arg2: i32) -> (i32, i32, i32) {
    %c0_i32 = arith.constant 0 : i32
    %c0_i32_0 = arith.constant 0 : i32
    %c0_i32_1 = arith.constant 0 : i32
    return %arg0, %c0_i32, %c0_i32_0 : i32, i32, i32
  }
  func.func @transform_3(%arg0: i32, %arg1: i32, %arg2: i32) -> (i32, i32, i32) {
    %c0_i32 = arith.constant 0 : i32
    %c0_i32_0 = arith.constant 0 : i32
    %c0_i32_1 = arith.constant 0 : i32
    return %arg0, %c0_i32, %c0_i32_0 : i32, i32, i32
  }
}

</mosaic_0001>

<llo_original>
// kernel: tpu_custom_call.1
$region0: #{tpu_custom_call.1}
  #allocation0 [shape = 'u32[]', space=smem, size = 0x4, offset = 0x4, fixed_abs, tag = 'smem constant byte address 0x4 - core index']
  #allocation1 [shape = 'u32[144,128]{1,0:T(1,128)}', space=vmem, size = 0x12000, scoped, tag = 'internal scratch']
  #allocation2 [shape = 'f32[4,128]{1,0:T(4,128)}', space=vmem, size = 0x800, scoped, tag = 'scratch operand']
  #allocation3 [shape = 'f32[4,128]{1,0:T(4,128)}', space=vmem, size = 0x800, scoped, tag = 'scratch operand']
  %s0 = inlined_call_operand.hbm [shape: f32[2,4,2,128], index: 0, kind: input, shape index: {}]
  %s1 = inlined_call_operand.hbm [shape: f32[2,4,2,128], index: 1, kind: input, shape index: {}]
  %s2 = inlined_call_operand.hbm [shape: f32[1,4,128], index: 2, kind: output, shape index: {0}]
  %s3 = inlined_call_operand.hbm [shape: f32[1,4,128], index: 3, kind: output, shape index: {1}]
  %4 = xla_tuple %s2, %s3
  %s5 = sld [smem:[#allocation0]]
  $region65: #{tpu_custom_call.1} parent=0
    _
  %s7 = ssub.s32 1, %s5
  %s8 = scalar_select 0, %s7, %s5
  $region1: #{tpu_custom_call.1} parent=0
    #allocation4 [shape = 'u8[8192]{0}', space=vmem, size = 0x2000, scoped, tag = 'input window, operand 0']
    #allocation5 [shape = 's32[2]{0}', space=sflag, size = 0x8, scoped, tag = 'scoped memory for tpu_custom_call.1']
    #allocation6 [shape = 's32[2]{0}', space=sflag, size = 0x8, scoped, tag = 'scoped memory for tpu_custom_call.1']
    #allocation7 [shape = 'u8[8192]{0}', space=vmem, size = 0x2000, scoped, tag = 'input window, operand 1']
    #allocation8 [shape = 's32[2]{0}', space=sflag, size = 0x8, scoped, tag = 'scoped memory for tpu_custom_call.1']
    #allocation9 [shape = 'u8[2048]{0}', space=vmem, size = 0x800, scoped, tag = 'output window, operand 0, single buffered']
    #allocation10 [shape = 'u8[2048]{0}', space=vmem, size = 0x800, scoped, tag = 'output window, operand 1, single buffered']
    #allocation11 [shape = 's32[1]{0}', space=sflag, size = 0x4, scoped, tag = 'scoped memory for tpu_custom_call.1']
    %9 = vsyncpa [#allocation5], 0
    %s10 = scalar_lea.sflag [#allocation5], 1
    %11 = vsyncpa %s10, 0
    %12 = vsyncpa [#allocation8], 0
    %s13 = scalar_lea.sflag [#allocation8], 1
    %14 = vsyncpa %s13, 0
    %15 = vsyncpa [#allocation6], 0
    %16 = vsyncpa [#allocation11], 0
    loop: start=0, step=1, limit=4
    $region2: #{tpu_custom_call.1} parent=1 // loop_pre_header
      _
    $region3: #{tpu_custom_call.1} parent=1 // loop_header
      %s18 = sphi 0, %s22
      %p19 = scmp.ge.s32.totalorder %s18, 4
      %s25 = sphi 0, %s44
      %s26 = sphi 0, %s40
      %s27 = sphi 0, %s36
      %s28 = sphi 0, %s25
      %s29 = sphi 0, %s26
      %s30 = sphi 0, %s27
      %s31 = sphi 0, %s28
      %s32 = sphi 0, %s29
      %s33 = sphi 0, %s30
      %s51 = sphi 0, %s53
      %s54 = sphi 0, %s51
      %s55 = sphi 0, %s54
      %s71 = sphi 0, %s55
      %s81 = sphi 0, %s83
      %s84 = sphi 0, %s81
      %s85 = sphi 0, %s84
      %s101 = sphi 0, %s85
      %s107 = sphi 0, %s109
      %s110 = sphi 0, %s107
      %s111 = sphi 0, %s110
      %s127 = sphi 0, %s111
      %s133 = sphi 0, %s135
      %s136 = sphi 0, %s133
      %s137 = sphi 0, %s136
      %s153 = sphi 0, %s137
    $region4: #{tpu_custom_call.1} parent=1 // loop_header_branch
      %21 = sbr.rel (%p19) target = $region8
    $region5: #{tpu_custom_call.1} parent=1 // loop_body
      %s23 = ssub.s32 %s18, 1
      %s24 = ssub.s32 %s18, 2
      %s34 = sadd.s32 1, %s27
      %p35 = scmp.ge.s32.totalorder %s34, 1
      %s36 = scalar_select %p35, 0, %s34
      %s37 = sadd.s32 1, %s26
      %s38 = scalar_select %p35, %s37, %s26
      %p39 = scmp.ge.s32.totalorder %s38, 2
      %s40 = scalar_select %p39, 0, %s38
      %s41 = sadd.s32 1, %s25
      %s42 = scalar_select %p39, %s41, %s25
      %p43 = scmp.ge.s32.totalorder %s42, 1
      %s44 = scalar_select %p43, 0, %s42
      %s45 = sadd.s32 %s25, %s27
      %s46 = sadd.s32 %s44, %s36
      %s47 = ssub.s32 %s26, %s40
      %s48 = ssub.s32 %s45, %s46
      %s49 = sor.u32 %s47, %s48
      %p50 = scmp.eq.s32.totalorder %s49, 0
      %s52 = sadd.s32 %s51, 1
      %s53 = scalar_select %p50, %s51, %s52
      %p56 = pneg %p50
      %p57 = scmp.eq.s32.totalorder %s18, 1
      %p58 = por %p56, %p57
      %p59 = scmp.ne.s32.totalorder %s51, %s54
      %p60 = scmp.eq.s32.totalorder %s18, 0
      %p61 = por %p59, %p60
      %p62 = scmp.ne.s32.totalorder %s51, %s54
      %p63 = scmp.eq.s32.totalorder %s23, 1
      %p64 = por %p62, %p63
      %p65 = scmp.ne.s32.totalorder %s54, %s55
      %p66 = scmp.eq.s32.totalorder %s23, 0
      %p67 = por %p65, %p66
      %p68 = scmp.ne.s32.totalorder %s54, %s55
      %p69 = scmp.eq.s32.totalorder %s24, 1
      %p70 = por %p68, %p69
      %p72 = scmp.ne.s32.totalorder %s55, %s71
      %p73 = scmp.eq.s32.totalorder %s24, 0
      %p74 = por %p72, %p73
      %s75 = sadd.s32 %s25, %s27
      %s76 = sadd.s32 %s44, %s36
      %s77 = ssub.s32 %s26, %s40
      %s78 = ssub.s32 %s75, %s76
      %s79 = sor.u32 %s77, %s78
      %p80 = scmp.eq.s32.totalorder %s79, 0
      %s82 = sadd.s32 %s81, 1
      %s83 = scalar_select %p80, %s81, %s82
      %p86 = pneg %p80
      %p87 = scmp.eq.s32.totalorder %s18, 1
      %p88 = por %p86, %p87
      %p89 = scmp.ne.s32.totalorder %s81, %s84
      %p90 = scmp.eq.s32.totalorder %s18, 0
      %p91 = por %p89, %p90
      %p92 = scmp.ne.s32.totalorder %s81, %s84
      %p93 = scmp.eq.s32.totalorder %s23, 1
      %p94 = por %p92, %p93
      %p95 = scmp.ne.s32.totalorder %s84, %s85
      %p96 = scmp.eq.s32.totalorder %s23, 0
      %p97 = por %p95, %p96
      %p98 = scmp.ne.s32.totalorder %s84, %s85
      %p99 = scmp.eq.s32.totalorder %s24, 1
      %p100 = por %p98, %p99
      %p102 = scmp.ne.s32.totalorder %s85, %s101
      %p103 = scmp.eq.s32.totalorder %s24, 0
      %p104 = por %p102, %p103
      %s105 = ssub.s32 %s25, %s44
      %p106 = scmp.eq.s32.totalorder %s105, 0
      %s108 = sadd.s32 %s107, 1
      %s109 = scalar_select %p106, %s107, %s108
      %p112 = pneg %p106
      %p113 = scmp.eq.s32.totalorder %s18, 1
      %p114 = por %p112, %p113
      %p115 = scmp.ne.s32.totalorder %s107, %s110
      %p116 = scmp.eq.s32.totalorder %s18, 0
      %p117 = por %p115, %p116
      %p118 = scmp.ne.s32.totalorder %s107, %s110
      %p119 = scmp.eq.s32.totalorder %s23, 1
      %p120 = por %p118, %p119
      %p121 = scmp.ne.s32.totalorder %s110, %s111
      %p122 = scmp.eq.s32.totalorder %s23, 0
      %p123 = por %p121, %p122
      %p124 = scmp.ne.s32.totalorder %s110, %s111
      %p125 = scmp.eq.s32.totalorder %s24, 1
      %p126 = por %p124, %p125
      %p128 = scmp.ne.s32.totalorder %s111, %s127
      %p129 = scmp.eq.s32.totalorder %s24, 0
      %p130 = por %p128, %p129
      %s131 = ssub.s32 %s25, %s44
      %p132 = scmp.eq.s32.totalorder %s131, 0
      %s134 = sadd.s32 %s133, 1
      %s135 = scalar_select %p132, %s133, %s134
      %p138 = pneg %p132
      %p139 = scmp.eq.s32.totalorder %s18, 1
      %p140 = por %p138, %p139
      %p141 = scmp.ne.s32.totalorder %s133, %s136
      %p142 = scmp.eq.s32.totalorder %s18, 0
      %p143 = por %p141, %p142
      %p144 = scmp.ne.s32.totalorder %s133, %s136
      %p145 = scmp.eq.s32.totalorder %s23, 1
      %p146 = por %p144, %p145
      %p147 = scmp.ne.s32.totalorder %s136, %s137
      %p148 = scmp.eq.s32.totalorder %s23, 0
      %p149 = por %p147, %p148
      %p150 = scmp.ne.s32.totalorder %s136, %s137
      %p151 = scmp.eq.s32.totalorder %s24, 1
      %p152 = por %p150, %p151
      %p154 = scmp.ne.s32.totalorder %s137, %s153
      %p155 = scmp.eq.s32.totalorder %s24, 0
      %p156 = por %p154, %p155
      %p157 = scmp.le.s32.totalorder 1, %s18
      %p158 = scmp.lt.s32.totalorder %s18, 3
      %p159 = pnand %p157, %p158
      %p160 = pneg %p159
      // Predicated region
      $region9: #{tpu_custom_call.1} parent=5 // pred_check
        _
      $region10: #{tpu_custom_call.1} parent=5 // pred_check_branch
        %162 = sbr.rel (%p159) target = $region12
      $region11: #{tpu_custom_call.1} parent=5 // pred_region
        %s163 = ssub.s32 %s18, 1
      $region12: #{tpu_custom_call.1} parent=5 // pred_fallthru
        _
      %p164 = scmp.lt.s32.totalorder %s18, 2
      // Predicated region
      $region13: #{tpu_custom_call.1} parent=5 // pred_check
        %p165 = pneg %p164
      $region14: #{tpu_custom_call.1} parent=5 // pred_check_branch
        %167 = sbr.rel (%p165) target = $region16
      $region15: #{tpu_custom_call.1} parent=5 // pred_region
        // Predicated region
        $region17: #{tpu_custom_call.1} parent=15 // pred_check
          %p168 = pneg %p61
        $region18: #{tpu_custom_call.1} parent=15 // pred_check_branch
          %170 = sbr.rel (%p168) target = $region20
        $region19: #{tpu_custom_call.1} parent=15 // pred_region
          %s171 = sand.u32 %s51, 1
          %s172 = scalar_lea.sflag [#allocation5], %s171
          %s173 = sand.u32 %s51, 1
          %s174 = smul.addr %s173, 8
          %s175 = scalar_lea.vmem [#allocation4], %s174
          %s176 = sadd.s32 %s25, %s27
          %s178 = ssub.s32 128, 128
          %179 = vsyncadd %s172, %s178
          %s180 = smul.addr %s26, 4
          %s181 = sadd.s32 %s176, %s180
          %s182 = smul.addr %s181, 32
          %s183 = scalar_lea.hbm %s0, %s182
          %s184 = sshll.u32 %s175, 4
          %s185 = int_to_ptr.vmem [resolvable:$true] %s184
          %190 = dma.hbm_to_vmem [thread:$0]  %s183, 128, %s185, %s172, 32, 32, 2
        $region20: #{tpu_custom_call.1} parent=15 // pred_fallthru
          _
        // Predicated region
        $region21: #{tpu_custom_call.1} parent=15 // pred_check
          %p191 = pneg %p91
        $region22: #{tpu_custom_call.1} parent=15 // pred_check_branch
          %193 = sbr.rel (%p191) target = $region24
        $region23: #{tpu_custom_call.1} parent=15 // pred_region
          %s194 = sand.u32 %s81, 1
          %s195 = scalar_lea.sflag [#allocation8], %s194
          %s196 = sand.u32 %s81, 1
          %s197 = smul.addr %s196, 8
          %s198 = scalar_lea.vmem [#allocation7], %s197
          %s199 = sadd.s32 %s25, %s27
          %s201 = ssub.s32 128, 128
          %202 = vsyncadd %s195, %s201
          %s203 = smul.addr %s26, 4
          %s204 = sadd.s32 %s199, %s203
          %s205 = smul.addr %s204, 32
          %s206 = scalar_lea.hbm %s1, %s205
          %s207 = sshll.u32 %s198, 4
          %s208 = int_to_ptr.vmem [resolvable:$true] %s207
          %213 = dma.hbm_to_vmem [thread:$0]  %s206, 128, %s208, %s195, 32, 32, 2
        $region24: #{tpu_custom_call.1} parent=15 // pred_fallthru
          _
      $region16: #{tpu_custom_call.1} parent=5 // pred_fallthru
        _
      %p214 = scmp.le.s32.totalorder 1, %s18
      %p215 = scmp.lt.s32.totalorder %s18, 3
      %p216 = pnand %p214, %p215
      %p217 = pneg %p216
      // Predicated region
      $region25: #{tpu_custom_call.1} parent=5 // pred_check
        _
      $region26: #{tpu_custom_call.1} parent=5 // pred_check_branch
        %219 = sbr.rel (%p216) target = $region28
      $region27: #{tpu_custom_call.1} parent=5 // pred_region
        %s220 = ssub.s32 %s18, 1
        %s221 = sand.u32 %s54, 1
        %s222 = scalar_lea.sflag [#allocation5], %s221
        %s223 = sand.u32 %s54, 1
        %s224 = smul.addr %s223, 8
        %s225 = scalar_lea.vmem [#allocation4], %s224
        // Predicated region
        $region29: #{tpu_custom_call.1} parent=27 // pred_check
          %p226 = pneg %p67
        $region30: #{tpu_custom_call.1} parent=27 // pred_check_branch
          %228 = sbr.rel (%p226) target = $region32
        $region31: #{tpu_custom_call.1} parent=27 // pred_region
          %229 = dma.done %s222, 128
        $region32: #{tpu_custom_call.1} parent=27 // pred_fallthru
          _
        %s230 = sand.u32 %s84, 1
        %s231 = scalar_lea.sflag [#allocation8], %s230
        %s232 = sand.u32 %s84, 1
        %s233 = smul.addr %s232, 8
        %s234 = scalar_lea.vmem [#allocation7], %s233
        // Predicated region
        $region33: #{tpu_custom_call.1} parent=27 // pred_check
          %p235 = pneg %p97
        $region34: #{tpu_custom_call.1} parent=27 // pred_check_branch
          %237 = sbr.rel (%p235) target = $region36
        $region35: #{tpu_custom_call.1} parent=27 // pred_region
          %238 = dma.done %s231, 128
        $region36: #{tpu_custom_call.1} parent=27 // pred_fallthru
          _
        %s239 = sand.u32 %s54, 1
        %s240 = scalar_lea.sflag [#allocation5], %s239
        %s241 = sand.u32 %s54, 1
        %s242 = smul.addr %s241, 8
        %s243 = scalar_lea.vmem [#allocation4], %s242
        %p244 = pneg %p67
        %p245 = pneg %p64
        %s246 = sand.u32 %s84, 1
        %s247 = scalar_lea.sflag [#allocation8], %s246
        %s248 = sand.u32 %s84, 1
        %s249 = smul.addr %s248, 8
        %s250 = scalar_lea.vmem [#allocation7], %s249
        %p251 = pneg %p97
        %p252 = pneg %p94
        %p253 = pneg %p123
        %p254 = pneg %p120
        %p255 = pneg %p149
        %p256 = pneg %p146
        %s257 = sadd.s32 %s28, %s30
        %s258 = sadd.s32 %s28, %s30
        %p259 = scmp.eq.s32.totalorder %s29, 0
        %p260 = scmp.eq.s32.totalorder %s30, 0
        %p261 = pnand %p259, %p260
        %p262 = pneg %p261
        // Predicated region
        $region37: #{tpu_custom_call.1} parent=27 // pred_check
          _
        $region38: #{tpu_custom_call.1} parent=27 // pred_check_branch
          %264 = sbr.rel (%p261) target = $region40
        $region39: #{tpu_custom_call.1} parent=27 // pred_region
          %265 = vst [vmem:[#allocation2] sm:$0xf] 0.0
          %266 = vst [vmem:[#allocation3] sm:$0xf] 0.0
        $region40: #{tpu_custom_call.1} parent=27 // pred_fallthru
          _
        %v267 = vld [vmem:[%s225] sm:$0x3]
        %v268 = vld [vmem:[%s225 + $0x2] sm:$0x3]
        %v269 = vld [vmem:[%s225 + $0x4] sm:$0x3]
        %v270 = vld [vmem:[%s225 + $0x6] sm:$0x3]
        %v271 = vld [vmem:[%s234] sm:$0x3]
        %v272 = vld [vmem:[%s234 + $0x2] sm:$0x3]
        %v273 = vld [vmem:[%s234 + $0x4] sm:$0x3]
        %v274 = vld [vmem:[%s234 + $0x6] sm:$0x3]
        %vm275 = vcmask 1041408
        %v276 = vsel %vm275, %v267, -inf
        %v277 = vsel %vm275, %v268, -inf
        %v278 = vsel %vm275, %v269, -inf
        %v279 = vsel %vm275, %v270, -inf
        %v280 = vmax.f32 %v276, %v277
        %v281 = vmax.f32 %v278, %v279
        %v282 = vmax.f32 %v280, %v281
        %v283 = vsub.f32 %v267, %v282
        %v284 = vsub.f32 %v268, %v282
        %v285 = vsub.f32 %v269, %v282
        %v286 = vsub.f32 %v270, %v282
        %v287 = vmul.f32 %v283, 1.442695
        %v288 = vpow.pop %v287
        %v289 = vmul.f32 %v284, 1.442695
        %v290 = vpow.pop %v289
        %v291 = vmul.f32 %v285, 1.442695
        %v292 = vpow.pop %v291
        %v293 = vmul.f32 %v286, 1.442695
        %v294 = vpow.pop %v293
        %v295 = vsel %vm275, %v288, 0.0
        %v296 = vsel %vm275, %v290, 0.0
        %v297 = vadd.f32 %v295, %v296
        %v298 = vsel %vm275, %v292, 0.0
        %v299 = vadd.f32 %v297, %v298
        %v300 = vsel %vm275, %v294, 0.0
        %v301 = vadd.f32 %v299, %v300
        %v302 = vrcp.pop %v301
        %v303 = vmul.f32 %v288, %v302
        %v304 = vmul.f32 %v290, %v302
        %v305 = vmul.f32 %v292, %v302
        %v306 = vmul.f32 %v294, %v302
        %v307 = vmul.f32 %v303, %v271
        %v308 = vmul.f32 %v304, %v272
        %v309 = vmul.f32 %v305, %v273
        %v310 = vmul.f32 %v306, %v274
        %v311 = vadd.f32 %v303, %v271
        %v312 = vadd.f32 %v304, %v272
        %v313 = vadd.f32 %v305, %v273
        %v314 = vadd.f32 %v306, %v274
        %v315 = vld [vmem:[#allocation2] sm:$0xf]
        %v316 = vsel %vm275, %v307, 0.0
        %v317 = vrot.slane %v316, 4
        %v318 = vadd.f32 %v316, %v317
        %v319 = vrot.slane %v318, 2
        %v320 = vadd.f32 %v318, %v319
        %v321 = vrot.slane %v320, 1
        %v322 = vadd.f32 %v320, %v321
        %v323 = vsel %vm275, %v308, 0.0
        %v324 = vrot.slane %v323, 4
        %v325 = vadd.f32 %v323, %v324
        %v326 = vrot.slane %v325, 2
        %v327 = vadd.f32 %v325, %v326
        %v328 = vrot.slane %v327, 1
        %v329 = vadd.f32 %v327, %v328
        %v330 = vsel %vm275, %v309, 0.0
        %v331 = vrot.slane %v330, 4
        %v332 = vadd.f32 %v330, %v331
        %v333 = vrot.slane %v332, 2
        %v334 = vadd.f32 %v332, %v333
        %v335 = vrot.slane %v334, 1
        %v336 = vadd.f32 %v334, %v335
        %v337 = vsel %vm275, %v310, 0.0
        %v338 = vrot.slane %v337, 4
        %v339 = vadd.f32 %v337, %v338
        %v340 = vrot.slane %v339, 2
        %v341 = vadd.f32 %v339, %v340
        %v342 = vrot.slane %v341, 1
        %v343 = vadd.f32 %v341, %v342
        %vm348 = vcmask 1041409
        %v349 = vsel %vm348, %v329, %v322
        %vm350 = vcmask 1042434
        %v351 = vsel %vm350, %v336, %v349
        %vm352 = vcmask 1043459
        %v353 = vsel %vm352, %v343, %v351
        %v355 = vadd.f32 %v315, %v353
        %356 = vst [vmem:[#allocation2] sm:$0xf] %v355
        %v357 = vld [vmem:[#allocation3] sm:$0xf]
        %v358 = vsel %vm275, %v311, 0.0
        %v359 = vrot.slane %v358, 4
        %v360 = vadd.f32 %v358, %v359
        %v361 = vrot.slane %v360, 2
        %v362 = vadd.f32 %v360, %v361
        %v363 = vrot.slane %v362, 1
        %v364 = vadd.f32 %v362, %v363
        %v365 = vsel %vm275, %v312, 0.0
        %v366 = vrot.slane %v365, 4
        %v367 = vadd.f32 %v365, %v366
        %v368 = vrot.slane %v367, 2
        %v369 = vadd.f32 %v367, %v368
        %v370 = vrot.slane %v369, 1
        %v371 = vadd.f32 %v369, %v370
        %v372 = vsel %vm275, %v313, 0.0
        %v373 = vrot.slane %v372, 4
        %v374 = vadd.f32 %v372, %v373
        %v375 = vrot.slane %v374, 2
        %v376 = vadd.f32 %v374, %v375
        %v377 = vrot.slane %v376, 1
        %v378 = vadd.f32 %v376, %v377
        %v379 = vsel %vm275, %v314, 0.0
        %v380 = vrot.slane %v379, 4
        %v381 = vadd.f32 %v379, %v380
        %v382 = vrot.slane %v381, 2
        %v383 = vadd.f32 %v381, %v382
        %v384 = vrot.slane %v383, 1
        %v385 = vadd.f32 %v383, %v384
        %v390 = vsel %vm348, %v371, %v364
        %v391 = vsel %vm350, %v378, %v390
        %v392 = vsel %vm352, %v385, %v391
        %v394 = vadd.f32 %v357, %v392
        %395 = vst [vmem:[#allocation3] sm:$0xf] %v394
        %p396 = scmp.eq.s32.totalorder %s29, 1
        %p397 = pnand %p396, %p260
        %p398 = pneg %p397
        // Predicated region
        $region41: #{tpu_custom_call.1} parent=27 // pred_check
          _
        $region42: #{tpu_custom_call.1} parent=27 // pred_check_branch
          %400 = sbr.rel (%p397) target = $region44
        $region43: #{tpu_custom_call.1} parent=27 // pred_region
          %v401 = vld [vmem:[#allocation2] sm:$0xf]
          %402 = vst [vmem:[#allocation9] sm:$0xf] %v401
          %v403 = vld [vmem:[#allocation3] sm:$0xf]
          %404 = vst [vmem:[#allocation10] sm:$0xf] %v403
        $region44: #{tpu_custom_call.1} parent=27 // pred_fallthru
          _
        // Predicated region
        $region45: #{tpu_custom_call.1} parent=27 // pred_check
          %p405 = pneg %p120
        $region46: #{tpu_custom_call.1} parent=27 // pred_check_branch
          %407 = sbr.rel (%p405) target = $region48
        $region47: #{tpu_custom_call.1} parent=27 // pred_region
          %s409 = ssub.s32 64, 64
          %410 = vsyncadd [#allocation6], %s409
          %s411 = smul.addr %s28, 64
          %s412 = scalar_lea.hbm %s2, %s411
          %s414 = sshll.u32 [#allocation9], 4
          %s415 = int_to_ptr.vmem [resolvable:$true] %s414
          %417 = dma.vmem_to_hbm [thread:$0]  %s415, 64, %s412, [#allocation6]
        $region48: #{tpu_custom_call.1} parent=27 // pred_fallthru
          _
        // Predicated region
        $region49: #{tpu_custom_call.1} parent=27 // pred_check
          %p418 = pneg %p146
        $region50: #{tpu_custom_call.1} parent=27 // pred_check_branch
          %420 = sbr.rel (%p418) target = $region52
        $region51: #{tpu_custom_call.1} parent=27 // pred_region
          %s422 = ssub.s32 64, 64
          %423 = vsyncadd [#allocation11], %s422
          %s424 = smul.addr %s28, 64
          %s425 = scalar_lea.hbm %s3, %s424
          %s427 = sshll.u32 [#allocation10], 4
          %s428 = int_to_ptr.vmem [resolvable:$true] %s427
          %430 = dma.vmem_to_hbm [thread:$0]  %s428, 64, %s425, [#allocation11]
        $region52: #{tpu_custom_call.1} parent=27 // pred_fallthru
          _
        // Predicated region
        $region53: #{tpu_custom_call.1} parent=27 // pred_check
          %p431 = pneg %p120
        $region54: #{tpu_custom_call.1} parent=27 // pred_check_branch
          %433 = sbr.rel (%p431) target = $region56
        $region55: #{tpu_custom_call.1} parent=27 // pred_region
          %434 = dma.done [#allocation6], 64
        $region56: #{tpu_custom_call.1} parent=27 // pred_fallthru
          _
        // Predicated region
        $region57: #{tpu_custom_call.1} parent=27 // pred_check
          %p435 = pneg %p146
        $region58: #{tpu_custom_call.1} parent=27 // pred_check_branch
          %437 = sbr.rel (%p435) target = $region60
        $region59: #{tpu_custom_call.1} parent=27 // pred_region
          %438 = dma.done [#allocation11], 64
        $region60: #{tpu_custom_call.1} parent=27 // pred_fallthru
          _
      $region28: #{tpu_custom_call.1} parent=5 // pred_fallthru
        _
      %p439 = scmp.le.s32.totalorder 2, %s18
      // Predicated region
      $region61: #{tpu_custom_call.1} parent=5 // pred_check
        %p440 = pneg %p439
      $region62: #{tpu_custom_call.1} parent=5 // pred_check_branch
        %442 = sbr.rel (%p440) target = $region64
      $region63: #{tpu_custom_call.1} parent=5 // pred_region
        %s443 = ssub.s32 %s18, 2
      $region64: #{tpu_custom_call.1} parent=5 // pred_fallthru
        _
    $region6: #{tpu_custom_call.1} parent=1 // loop_footer
      %s22 = sadd.s32 1, %s18
    $region7: #{tpu_custom_call.1} parent=1 // loop_footer_branch
      %17 = sbr.rel target = $region3
    $region8: #{tpu_custom_call.1} parent=1 // loop_exit
      _
    %444 = vsyncpa [#allocation5], 1
    %s445 = scalar_lea.sflag [#allocation5], 1
    %446 = vsyncpa %s445, 1
    %447 = vsyncpa [#allocation8], 1
    %s448 = scalar_lea.sflag [#allocation8], 1
    %449 = vsyncpa %s448, 1
    %450 = vsyncpa [#allocation6], 1
    %s451 = scalar_lea.sflag [#allocation6], 1
    %452 = vsyncpa %s451, 1
    %453 = vsyncpa [#allocation11], 1

</llo_original>
